<compile_context>
chip_gen: v5e
topology: v5e:2x2
jax: 0.10.0
libtpu: 0.0.40
codegen_flags: <defaults>
</compile_context>

<pallas_src>
import math

import jax
import jax.numpy as jnp
from jax.experimental import pallas as pl
from jax.experimental.pallas import tpu as pltpu


_LANE_MIN = 128                    # TPU lane width
_LANE_MAX = 1024                   # widen lane dim up to this for lane-dense stores
_TARGET_BLOCK_BYTES = 4 * 1024 * 1024   # ~4 MiB blocks: 4x block <= 16 MiB resident
_VMEM_LIMIT_BYTES = 32 * 1024 * 1024    # headroom; <= v7x physical (64 MiB)


def _copy_kernel(x_ref, o_ref):
    o_ref[...] = x_ref[...]


def _sublane_multiple(dtype):
    """Sublane packing factor: 8 for 4-byte dtypes, 16 for 2-byte, 32 for 1-byte."""
    item = jnp.dtype(dtype).itemsize
    if item >= 4:
        return 8
    return 32 // item


def _lane_dense_layout(total_elems):
    """Return (rows, lane) with lane a multiple of 128 dividing the element count."""
    if total_elems == 0 or total_elems % _LANE_MIN:
        return None
    lane = _LANE_MIN
    while lane * 2 <= _LANE_MAX and total_elems % (lane * 2) == 0:
        lane *= 2
    return total_elems // lane, lane


def _pick_row_tile(rows, lane, dtype):
    """Row tile: ~4 MiB blocks, sublane-multiple rows, >=2 tiles when possible."""
    sub = _sublane_multiple(dtype)
    item = jnp.dtype(dtype).itemsize
    rt = max(sub, (_TARGET_BLOCK_BYTES // (lane * item)) // sub * sub)
    rt = min(rt, rows)
    # v7x: aim for >=2 row tiles so both TensorCores stream HBM.
    if rt >= rows and rows > sub:
        half = -(-rows // 2)             # ceil(rows / 2)
        half = -(-half // sub) * sub     # round up to the sublane multiple
        if half < rows:
            rt = half
    # Legality: rt is either a multiple of `sub` or equal to the full row count.
    return rt


def _compiler_params():
    return pltpu.CompilerParams(
        dimension_semantics=("parallel",),
        vmem_limit_bytes=_VMEM_LIMIT_BYTES,
    )


def _cost_estimate(x):
    nbytes = x.size * jnp.dtype(x.dtype).itemsize
    return pl.CostEstimate(flops=0, transcendentals=0, bytes_accessed=2 * nbytes)


def _copy_lane_dense(x, rows, lane):
    """Copy via a lane-dense (rows, lane) view with a cdiv row grid."""
    rt = _pick_row_tile(rows, lane, x.dtype)
    x2 = x.reshape(rows, lane)
    out2 = pl.pallas_call(
        _copy_kernel,
        out_shape=jax.ShapeDtypeStruct((rows, lane), x.dtype),
        grid=(pl.cdiv(rows, rt),),
        in_specs=[pl.BlockSpec((rt, lane), lambda i: (i, 0))],
        out_specs=pl.BlockSpec((rt, lane), lambda i: (i, 0)),
        compiler_params=_compiler_params(),
        cost_estimate=_cost_estimate(x),
    )(x2)
    return out2.reshape(x.shape)


def _copy_leading_tiled(x):
    """Copy for shapes whose element count is not a multiple of 128.

    Tiles over the leading dim with full trailing dims (full-extent last dims
    are always layout-legal) — never a single whole-array VMEM block for
    multi-row tensors, so VMEM stays bounded and pipelining is preserved.
    """
    if x.ndim < 2 or x.size == 0:
        # Scalar / 1-D (tiny in practice): single whole-array block is legal.
        return pl.pallas_call(
            _copy_kernel,
            out_shape=jax.ShapeDtypeStruct(x.shape, x.dtype),
            compiler_params=_compiler_params(),
            cost_estimate=_cost_estimate(x),
        )(x)

    lead = x.shape[0]
    rest = x.shape[1:]
    rest_bytes = math.prod(rest) * jnp.dtype(x.dtype).itemsize
    lead_tile = max(1, min(lead, _TARGET_BLOCK_BYTES // max(rest_bytes, 1)))
    if x.ndim == 2 and lead_tile < lead:
        # Second-to-last block dim must be a sublane multiple (or the full dim).
        sub = _sublane_multiple(x.dtype)
        lead_tile = max(sub, (lead_tile // sub) * sub)
        if lead_tile >= lead:
            lead_tile = lead

    ndim = x.ndim
    block = (lead_tile,) + rest
    index_map = lambda i: (i,) + (0,) * (ndim - 1)
    return pl.pallas_call(
        _copy_kernel,
        out_shape=jax.ShapeDtypeStruct(x.shape, x.dtype),
        grid=(pl.cdiv(lead, lead_tile),),
        in_specs=[pl.BlockSpec(block, index_map)],
        out_specs=pl.BlockSpec(block, index_map),
        compiler_params=_compiler_params(),
        cost_estimate=_cost_estimate(x),
    )(x)


def _pallas_copy(x):
    """Genuine copy of `x` into a NEW buffer via a tuned Pallas TPU kernel."""
    layout = _lane_dense_layout(x.size)
    if layout is None:
        return _copy_leading_tiled(x)
    rows, lane = layout
    return _copy_lane_dense(x, rows, lane)


def base_decoder_forward(targets, *, allow_passthrough=False,
                         copy_to_new_buffer=False, **kwargs):
    """Mirrors BaseDecoder.forward.

    Default (allow_passthrough=False) matches PyTorch: raises NotImplementedError.
    allow_passthrough=True returns `targets` untouched — zero HBM traffic,
    the fastest correct realisation of an abstract pass (review recommendation).
    copy_to_new_buffer=True additionally materialises `targets` into a distinct
    buffer using the tuned Pallas copy kernel (no input/output aliasing).
    """
    if not allow_passthrough:
        raise NotImplementedError(
            "BaseDecoder.forward is abstract in the reference module.")
    if not copy_to_new_buffer:
        return targets
    return _pallas_copy(targets)


def base_decoder_inference(tokens, **kwargs):
    raise NotImplementedError(
        "BaseDecoder.inference is abstract in the reference module.")


if __name__ == "__main__":
    key = jax.random.PRNGKey(0)
    batch, seq, hidden = 2, 8, 32
    targets = jax.random.normal(key, (batch, seq, hidden), dtype=jnp.float32)

    # 1) Faithful behaviour: forward() / inference() raise NotImplementedError.
    for fn, arg in ((base_decoder_forward, targets),
                    (base_decoder_inference, jnp.zeros((batch, seq), jnp.int32))):
        raised = False
        try:
            fn(arg)
        except NotImplementedError:
            raised = True
        assert raised, f"{fn.__name__} should raise NotImplementedError"

    # 2) Recommended zero-cost passthrough: no kernel, no HBM traffic.
    out_fast = base_decoder_forward(targets, allow_passthrough=True)
    assert out_fast is targets

    # 3) Genuine Pallas copy into a NEW buffer (lane-dense tiles, no aliasing).
    out = base_decoder_forward(targets, allow_passthrough=True,
                               copy_to_new_buffer=True)
    out = jax.block_until_ready(out)
    assert out.shape == targets.shape and out.dtype == targets.dtype
    assert out is not targets
    assert bool(jnp.array_equal(out, targets))

    # 4) cdiv grid with a partial (masked) last row block: rows=15, rt=8.
    x2 = jax.random.normal(jax.random.PRNGKey(1), (5, 384), dtype=jnp.float32)
    y2 = jax.block_until_ready(_pallas_copy(x2))
    assert bool(jnp.array_equal(y2, x2))

    # 5) Element count not a multiple of 128 -> leading-dim tiled path.
    x3 = jax.random.normal(jax.random.PRNGKey(2), (3, 5, 7), dtype=jnp.float32)
    y3 = jax.block_until_ready(_pallas_copy(x3))
    assert bool(jnp.array_equal(y3, x3))

    # 6) bf16: sublane-multiple (16) aware tiling, unmasked stores.
    x4 = jax.random.normal(jax.random.PRNGKey(3), (4, 16, 64)).astype(jnp.bfloat16)
    y4 = jax.block_until_ready(_pallas_copy(x4))
    assert bool(jnp.array_equal(y4, x4))

    print("KERNEL_OK")
</pallas_src>

<mosaic_0001>
module attributes {stable_mosaic.version = 11 : i64} {
  func.func @_copy_kernel(%arg0: i32, %arg1: memref<1x512xf32, #tpu.memory_space<vmem>>, %arg2: memref<1x512xf32, #tpu.memory_space<vmem>>) attributes {dimension_semantics = [#tpu.dimension_semantics<parallel>], iteration_bounds = array<i64: 1>, scalar_prefetch = 0 : i64, scratch_operands = 0 : i64, tpu.core_type = #tpu.core_type<tc>, window_params = [{transform_indices = @transform_0, window_bounds = array<i64: 1, 512>}, {transform_indices = @transform_1, window_bounds = array<i64: 1, 512>}]} {
    %c0 = arith.constant 0 : index
    %c0_0 = arith.constant 0 : index
    %0 = vector.load %arg1[%c0, %c0_0] : memref<1x512xf32, #tpu.memory_space<vmem>>, vector<1x512xf32>
    %c0_1 = arith.constant 0 : index
    %c0_2 = arith.constant 0 : index
    %1 = vector.load %arg2[%c0_1, %c0_2] : memref<1x512xf32, #tpu.memory_space<vmem>>, vector<1x512xf32>
    tpu.vector_store %arg2[%c0_1, %c0_2], %0 {strides = array<i32>} : memref<1x512xf32, #tpu.memory_space<vmem>>, vector<1x512xf32>,
    return
  }
  func.func @transform_0(%arg0: i32) -> (i32, i32) {
    %c0_i32 = arith.constant 0 : i32
    %c0_i32_0 = arith.constant 0 : i32
    return %arg0, %c0_i32 : i32, i32
  }
  func.func @transform_1(%arg0: i32) -> (i32, i32) {
    %c0_i32 = arith.constant 0 : i32
    %c0_i32_0 = arith.constant 0 : i32
    return %arg0, %c0_i32 : i32, i32
  }
}

</mosaic_0001>

<llo_original>
// kernel: tpu_custom_call.1
$region0: #{tpu_custom_call.1}
  #allocation0 [shape = 'u32[]', space=smem, size = 0x4, offset = 0x4, fixed_abs, tag = 'smem constant byte address 0x4 - core index']
  #allocation1 [shape = 'u32[72,128]{1,0:T(1,128)}', space=vmem, size = 0x9000, scoped, tag = 'internal scratch']
  %s0 = inlined_call_operand.hbm [shape: f32[1,512], index: 0, kind: input, shape index: {}]
  %s1 = inlined_call_operand.hbm [shape: f32[1,512], index: 1, kind: output, shape index: {}]
  %s2 = sld [smem:[#allocation0]]
  $region18: #{tpu_custom_call.1} parent=0
    _
  %s4 = ssub.s32 1, %s2
  %s5 = scalar_select 0, %s4, %s2
  $region1: #{tpu_custom_call.1} parent=0
    #allocation2 [shape = 'u8[2048]{0}', space=vmem, size = 0x800, scoped, tag = 'input window, operand 0, single buffered']
    #allocation3 [shape = 's32[1]{0}', space=sflag, size = 0x4, scoped, tag = 'scoped memory for tpu_custom_call.1']
    #allocation4 [shape = 's32[1]{0}', space=sflag, size = 0x4, scoped, tag = 'scoped memory for tpu_custom_call.1']
    #allocation5 [shape = 'u8[2048]{0}', space=vmem, size = 0x800, scoped, tag = 'output window, operand 0, single buffered']
    %6 = vsyncpa [#allocation3], 0
    %7 = vsyncpa [#allocation4], 0
    // Predicated region
    $region2: #{tpu_custom_call.1} parent=1 // pred_check
      _
    $region3: #{tpu_custom_call.1} parent=1 // pred_check_branch
      %9 = sbr.rel (0) target = $region5
    $region4: #{tpu_custom_call.1} parent=1 // pred_region
      %11 = vsyncadd [#allocation3], 0
      %s13 = sshll.u32 %s0, 4
      %s14 = int_to_ptr.hbm [resolvable:$true] %s13
      %s15 = sshll.u32 [#allocation2], 4
      %s16 = int_to_ptr.vmem [resolvable:$true] %s15
      %18 = dma.hbm_to_vmem [thread:$0]  %s14, 64, %s16, [#allocation3]
    $region5: #{tpu_custom_call.1} parent=1 // pred_fallthru
      _
    // Predicated region
    $region6: #{tpu_custom_call.1} parent=1 // pred_check
      _
    $region7: #{tpu_custom_call.1} parent=1 // pred_check_branch
      %20 = sbr.rel (0) target = $region9
    $region8: #{tpu_custom_call.1} parent=1 // pred_region
      %22 = dma.done [#allocation3], 64
    $region9: #{tpu_custom_call.1} parent=1 // pred_fallthru
      _
    %v23 = vld [vmem:[#allocation2] sm:$0xf]
    %v24 = vlaneseq
    %vm25 = vcmp.ge.s32.totalorder %v24, 0
    %vm26 = vcmp.lt.s32.totalorder %v24, 512
    %vm27 = vmand %vm25, %vm26
    %28 = vst.msk [vmem:[#allocation5] sm:$0xf] %vm27, %v23
    // Predicated region
    $region10: #{tpu_custom_call.1} parent=1 // pred_check
      _
    $region11: #{tpu_custom_call.1} parent=1 // pred_check_branch
      %30 = sbr.rel (0) target = $region13
    $region12: #{tpu_custom_call.1} parent=1 // pred_region
      %32 = vsyncadd [#allocation4], 0
      %s34 = sshll.u32 [#allocation5], 4
      %s35 = int_to_ptr.vmem [resolvable:$true] %s34
      %s36 = sshll.u32 %s1, 4
      %s37 = int_to_ptr.hbm [resolvable:$true] %s36
      %39 = dma.vmem_to_hbm [thread:$0]  %s35, 64, %s37, [#allocation4]
    $region13: #{tpu_custom_call.1} parent=1 // pred_fallthru
      _
    // Predicated region
    $region14: #{tpu_custom_call.1} parent=1 // pred_check
      _
    $region15: #{tpu_custom_call.1} parent=1 // pred_check_branch
      %41 = sbr.rel (0) target = $region17
    $region16: #{tpu_custom_call.1} parent=1 // pred_region
      %43 = dma.done [#allocation4], 64
    $region17: #{tpu_custom_call.1} parent=1 // pred_fallthru
      _
    %44 = vsyncpa [#allocation3], 1
    %45 = vsyncpa [#allocation4], 1

</llo_original>
